<compile_context>
chip_gen: v7x
topology: tpu7x:2x2x1
jax: 0.10.0
libtpu: 0.0.40
codegen_flags: <defaults>
</compile_context>

<pallas_src>
import functools

import jax
import jax.numpy as jnp
from jax import lax
from jax.experimental import pallas as pl
from jax.experimental.pallas import tpu as pltpu


def _round_up(x, m):
    return ((x + m - 1) // m) * m


# ---------------------------------------------------------------------------
# Kernel 1: node-wise diffusion MLP  (Linear -> tanh -> Linear -> tanh)
# Node-tiled grid, independent tiles -> "parallel" (megacore on v7x).
# ---------------------------------------------------------------------------
def diffusion_kernel(x_ref, w1_ref, b1_ref, w2_ref, b2_ref, out_ref):
    # x, w1, w2: bf16 (MXU); biases / activations: f32.
    h = jnp.tanh(jnp.dot(x_ref[...], w1_ref[...],
                         preferred_element_type=jnp.float32) + b1_ref[...])
    out_ref[...] = jnp.tanh(
        jnp.dot(h.astype(jnp.bfloat16), w2_ref[...],
                preferred_element_type=jnp.float32) + b2_ref[...])


def run_diffusion(x_bf, w1_bf, b1, w2_bf, b2, *, node_tile):
    n_pad, d = x_bf.shape
    const = lambda i: (0, 0)
    return pl.pallas_call(
        diffusion_kernel,
        out_shape=jax.ShapeDtypeStruct((n_pad, d), jnp.float32),
        grid=(n_pad // node_tile,),
        in_specs=[
            pl.BlockSpec((node_tile, d), lambda i: (i, 0)),   # x tile (bf16)
            pl.BlockSpec((d, d), const),                      # w1 (bf16, resident)
            pl.BlockSpec((1, d), const),                      # b1 (f32)
            pl.BlockSpec((d, d), const),                      # w2 (bf16, resident)
            pl.BlockSpec((1, d), const),                      # b2 (f32)
        ],
        out_specs=pl.BlockSpec((node_tile, d), lambda i: (i, 0)),
        compiler_params=pltpu.CompilerParams(
            dimension_semantics=("parallel",),
            vmem_limit_bytes=64 * 1024 * 1024),
        cost_estimate=pl.CostEstimate(
            flops=4 * n_pad * d * d,
            transcendentals=2 * n_pad * d,
            bytes_accessed=(n_pad * d * 2 + 2 * d * d * 2 + 2 * d * 4
                            + n_pad * d * 4)),
    )(x_bf, w1_bf, b1, w2_bf, b2)


# ---------------------------------------------------------------------------
# Kernel 2: edge-wise attention + messages + dst-sorted segment scatter-add.
# Grid = (edge_shard "parallel", edge_tile "arbitrary").  dst indices are
# scalar-prefetched into SMEM; the per-shard (N, D) output block is resident
# across the tile axis and accumulated into directly (no extra scratch).
# ---------------------------------------------------------------------------
def edge_message_kernel(dst_ref,                                    # SMEM (E_pad,)
                        xsd_ref, ld_ref, eattr_ref,
                        wa_sd_ref, wa_attr_ref, ba1_ref, wa2_ref,
                        ba2_ref,                                    # SMEM (1,1)
                        out_ref,
                        msg_ref,
                        *, edge_tile, tiles_per_shard):
    s = pl.program_id(0)
    t = pl.program_id(1)

    @pl.when(t == 0)
    def _init():
        out_ref[...] = jnp.zeros_like(out_ref)

    # Fused attention layer 1: single K=2D MXU matmul on [x_src | x_dst].
    pre = (jnp.dot(xsd_ref[...], wa_sd_ref[...],
                   preferred_element_type=jnp.float32)
           + eattr_ref[...] * wa_attr_ref[...]                      # (T,1)*(1,D)
           + ba1_ref[...])
    a = jnp.tanh(pre)                                               # (T, D) f32
    # Linear(D, 1) kept as a VPU/XLU reduction (f32, MXU stays free).
    logits = jnp.sum(a * wa2_ref[...], axis=-1, keepdims=True) + ba2_ref[0, 0]
    attn = jax.nn.sigmoid(logits)                                   # (T, 1) f32

    # ld_ref already carries 1/deg[dst[e]] and has zero rows for pad edges,
    # so padded edges contribute nothing without an explicit mask.
    msg_ref[...] = attn * ld_ref[...]

    base = (s * tiles_per_shard + t) * edge_tile
    d_lat = msg_ref.shape[1]

    # dst-sorted segment accumulation: one (1, D) RMW per unique dst in tile.
    def body(e, carry):
        run, prev = carry
        cur = dst_ref[base + e]
        row = msg_ref[pl.ds(e, 1), :]
        flush = cur != prev

        @pl.when(flush)
        def _():
            out_ref[pl.ds(prev, 1), :] = out_ref[pl.ds(prev, 1), :] + run

        run = jnp.where(flush, row, run + row)
        return run, cur

    run0 = jnp.zeros((1, d_lat), jnp.float32)
    run, prev = lax.fori_loop(0, edge_tile, body, (run0, dst_ref[base]),
                              unroll=8)
    out_ref[pl.ds(prev, 1), :] = out_ref[pl.ds(prev, 1), :] + run


def run_edge_messages(dst_idx, xsd, ld_scaled, eattr,
                      wa_sd, wa_attr, ba1, wa2_row, ba2,
                      *, num_nodes, latent_dim, edge_tile, num_shards):
    n, d = num_nodes, latent_dim
    e_pad = xsd.shape[0]
    num_tiles = e_pad // edge_tile
    tiles_per_shard = num_tiles // num_shards

    etile = lambda s, t, dst: (s * tiles_per_shard + t, 0)
    const = lambda s, t, dst: (0, 0)

    kernel = functools.partial(edge_message_kernel,
                               edge_tile=edge_tile,
                               tiles_per_shard=tiles_per_shard)

    grid_spec = pltpu.PrefetchScalarGridSpec(
        num_scalar_prefetch=1,                       # sorted dst -> SMEM
        grid=(num_shards, tiles_per_shard),
        in_specs=[
            pl.BlockSpec((edge_tile, 2 * d), etile),  # [x_src | x_dst] (bf16)
            pl.BlockSpec((edge_tile, d), etile),      # local_diff[src]/deg (f32)
            pl.BlockSpec((edge_tile, 1), etile),      # edge_attr (f32)
            pl.BlockSpec((2 * d, d), const),          # stacked W1 (bf16, resident)
            pl.BlockSpec((1, d), const),              # wa_attr (f32)
            pl.BlockSpec((1, d), const),              # ba1 (f32)
            pl.BlockSpec((1, d), const),              # wa2_row (f32)
            pl.BlockSpec(memory_space=pltpu.MemorySpace.SMEM),   # ba2 scalar
        ],
        out_specs=pl.BlockSpec((None, n, d), lambda s, t, dst: (s, 0, 0)),
        scratch_shapes=[pltpu.VMEM((edge_tile, d), jnp.float32)],  # msg tile
    )

    out = pl.pallas_call(
        kernel,
        grid_spec=grid_spec,
        out_shape=jax.ShapeDtypeStruct((num_shards, n, d), jnp.float32),
        compiler_params=pltpu.CompilerParams(
            dimension_semantics=("parallel", "arbitrary"),
            vmem_limit_bytes=48 * 1024 * 1024),       # v7x-safe (64 MiB phys)
        cost_estimate=pl.CostEstimate(
            flops=2 * e_pad * (2 * d) * d + 8 * e_pad * d,
            transcendentals=e_pad * d + e_pad,
            bytes_accessed=(e_pad * 2 * d * 2 + e_pad * d * 4 + 2 * e_pad * 4
                            + 2 * d * d * 2 + 3 * d * 4
                            + num_shards * n * d * 4)),
    )(dst_idx, xsd, ld_scaled, eattr, wa_sd, wa_attr, ba1, wa2_row, ba2)
    return out.sum(axis=0)                            # one XLA add over shards


# ---------------------------------------------------------------------------
# Wrapper: EnhancedODEFunc.forward(t, x)  (t is unused by the module)
# ---------------------------------------------------------------------------
def enhanced_ode_func(x, params, edge_index, edge_attr, *,
                      node_tile=256, edge_tile=256, num_edge_shards=2):
    N, D = x.shape
    E = edge_index.shape[1]
    src = edge_index[0].astype(jnp.int32)
    dst = edge_index[1].astype(jnp.int32)

    # bf16 at the MXU boundary only (f32 accumulation, f32 element-wise math).
    x_bf = x.astype(jnp.bfloat16)
    w1_bf = params["w1"].astype(jnp.bfloat16)
    w2_bf = params["w2"].astype(jnp.bfloat16)
    wa_sd_bf = jnp.concatenate([params["wa_src"], params["wa_dst"]],
                               axis=0).astype(jnp.bfloat16)         # (2D, D)

    # ---- kernel 1: local_diff = diffusion MLP over nodes ----
    node_tile = min(node_tile, _round_up(N, 8))
    n_pad = _round_up(N, node_tile)
    x_bf_p = jnp.pad(x_bf, ((0, n_pad - N), (0, 0))) if n_pad != N else x_bf
    local_diff = run_diffusion(x_bf_p, w1_bf, params["b1"], w2_bf, params["b2"],
                               node_tile=node_tile)[:N]

    # ---- wrapper-side O(E) / O(E*D) prep (no one-hot matmuls) ----
    # Sort edges by dst so the in-kernel scatter does one RMW per unique dst.
    order = jnp.argsort(dst)
    src_s = src[order]
    dst_s = dst[order]
    eattr_s = edge_attr.astype(jnp.float32)[order]

    # degree from src indices (matches the PyTorch module), O(E) scatter.
    degree = jnp.maximum(jnp.zeros((N,), jnp.float32).at[src].add(1.0), 1.0)
    deg_inv = 1.0 / degree

    # One stacked bf16 gather for [x_src | x_dst]; f32 gather for local_diff.
    rows = jnp.take(x_bf, jnp.concatenate([src_s, dst_s]), axis=0)  # (2E, D) bf16
    xsd = jnp.concatenate([rows[:E], rows[E:]], axis=1)             # (E, 2D) bf16
    # Fold 1/deg[dst[e]] into the message operand (no finalize pass in-kernel).
    ld_scaled = (jnp.take(local_diff, src_s, axis=0)
                 * jnp.take(deg_inv, dst_s)[:, None])               # (E, D) f32

    # Pad the edge axis; padded ld rows are zero -> zero messages (no mask).
    num_shards = max(1, num_edge_shards)
    edge_tile = min(edge_tile, _round_up(pl.cdiv(E, num_shards), 8))
    e_pad = _round_up(E, edge_tile * num_shards)
    pad = e_pad - E
    if pad:
        xsd = jnp.pad(xsd, ((0, pad), (0, 0)))
        ld_scaled = jnp.pad(ld_scaled, ((0, pad), (0, 0)))
        eattr_s = jnp.pad(eattr_s, ((0, pad), (0, 0)))
        dst_s = jnp.pad(dst_s, (0, pad), mode="edge")   # stay in last segment

    # ---- kernel 2: attention + messages + segment scatter-add ----
    return run_edge_messages(
        dst_s, xsd, ld_scaled, eattr_s,
        wa_sd_bf, params["wa_attr"], params["ba1"], params["wa2_row"],
        params["ba2"],
        num_nodes=N, latent_dim=D, edge_tile=edge_tile, num_shards=num_shards)


# ---------------------------------------------------------------------------
# Plain-JAX f32 reference mirroring the PyTorch forward.
# ---------------------------------------------------------------------------
def ref_forward(x, params, edge_index, edge_attr):
    local_diff = jnp.tanh(jnp.tanh(x @ params["w1"] + params["b1"])
                          @ params["w2"] + params["b2"])
    src, dst = edge_index[0], edge_index[1]
    wa1 = jnp.concatenate([params["wa_src"], params["wa_dst"],
                           params["wa_attr"]], axis=0)              # (2D+1, D)
    wa2 = params["wa2_row"].T                                       # (D, 1)
    concat = jnp.concatenate([x[src], x[dst], edge_attr], axis=1)
    attn = jax.nn.sigmoid(jnp.tanh(concat @ wa1 + params["ba1"]) @ wa2
                          + params["ba2"])
    msg = attn * local_diff[src]
    out = jnp.zeros_like(x).at[dst].add(msg)
    degree = jnp.maximum(jnp.zeros(x.shape[0]).at[src].add(1.0), 1.0)
    return out / degree[:, None]


def init_params(key, latent_dim):
    D = latent_dim
    ks = jax.random.split(key, 8)

    def lin(k, fan_in, shape):
        return (jax.random.uniform(k, shape, jnp.float32, -1.0, 1.0)
                / jnp.sqrt(jnp.float32(fan_in)))

    return {
        # diffusion: Linear(D,D) -> tanh -> Linear(D,D) -> tanh
        "w1": lin(ks[0], D, (D, D)), "b1": lin(ks[1], D, (1, D)),
        "w2": lin(ks[2], D, (D, D)), "b2": lin(ks[3], D, (1, D)),
        # attention: Linear(2D+1, D) split into [src | dst | attr] slabs
        "wa_src": lin(ks[4], 2 * D + 1, (D, D)),
        "wa_dst": lin(ks[5], 2 * D + 1, (D, D)),
        "wa_attr": lin(ks[6], 2 * D + 1, (1, D)),
        "ba1": lin(ks[7], 2 * D + 1, (1, D)),
        # attention: Linear(D, 1); stored as a (1, D) row and a (1, 1) bias
        "wa2_row": lin(jax.random.fold_in(key, 100), D, (1, D)),
        "ba2": lin(jax.random.fold_in(key, 101), D, (1, 1)),
    }


if __name__ == "__main__":
    # nodes, latent_dim (lane-dense multiple of 128), edges
    N, D, E = 32, 128, 128

    key = jax.random.PRNGKey(0)
    k_x, k_p, k_a = jax.random.split(key, 3)

    x = jax.random.normal(k_x, (N, D), jnp.float32)
    params = init_params(k_p, D)

    # deterministic edge list covering all node indices
    src = jnp.arange(E, dtype=jnp.int32) % N
    dst = (jnp.arange(E, dtype=jnp.int32) * 3 + 1) % N
    edge_index = jnp.stack([src, dst], axis=0)                      # (2, E)
    edge_attr = jax.random.normal(k_a, (E, 1), jnp.float32)

    out = enhanced_ode_func(x, params, edge_index, edge_attr,
                            node_tile=256, edge_tile=256, num_edge_shards=2)
    out = jax.block_until_ready(out)

    ref = ref_forward(x, params, edge_index, edge_attr)
    assert out.shape == (N, D)
    # bf16 MXU operands with f32 accumulation: tolerance relaxed vs f32 ref.
    assert jnp.allclose(out, ref, atol=2e-2, rtol=2e-2), float(
        jnp.max(jnp.abs(out - ref)))

    print("KERNEL_OK")
</pallas_src>

<mosaic_0001>
module attributes {stable_mosaic.version = 11 : i64} {
  func.func @diffusion_kernel(%arg0: i32, %arg1: memref<32x128xbf16, #tpu.memory_space<vmem>>, %arg2: memref<128x128xbf16, #tpu.memory_space<vmem>>, %arg3: memref<1x128xf32, #tpu.memory_space<vmem>>, %arg4: memref<128x128xbf16, #tpu.memory_space<vmem>>, %arg5: memref<1x128xf32, #tpu.memory_space<vmem>>, %arg6: memref<32x128xf32, #tpu.memory_space<vmem>>) attributes {dimension_semantics = [#tpu.dimension_semantics<parallel>], iteration_bounds = array<i64: 1>, scalar_prefetch = 0 : i64, scratch_operands = 0 : i64, tpu.core_type = #tpu.core_type<tc>, window_params = [{transform_indices = @transform_0, window_bounds = array<i64: 32, 128>}, {pipeline_mode = #tpu.pipeline_mode<synchronous>, transform_indices = @transform_1, window_bounds = array<i64: 128, 128>}, {pipeline_mode = #tpu.pipeline_mode<synchronous>, transform_indices = @transform_2, window_bounds = array<i64: 1, 128>}, {pipeline_mode = #tpu.pipeline_mode<synchronous>, transform_indices = @transform_3, window_bounds = array<i64: 128, 128>}, {pipeline_mode = #tpu.pipeline_mode<synchronous>, transform_indices = @transform_4, window_bounds = array<i64: 1, 128>}, {transform_indices = @transform_5, window_bounds = array<i64: 32, 128>}]} {
    %c0 = arith.constant 0 : index
    %c0_0 = arith.constant 0 : index
    %0 = vector.load %arg1[%c0, %c0_0] : memref<32x128xbf16, #tpu.memory_space<vmem>>, vector<32x128xbf16>
    %c0_1 = arith.constant 0 : index
    %c0_2 = arith.constant 0 : index
    %1 = vector.load %arg2[%c0_1, %c0_2] : memref<128x128xbf16, #tpu.memory_space<vmem>>, vector<128x128xbf16>
    %cst = arith.constant dense<0.000000e+00> : vector<32x128xf32>
    %2 = tpu.matmul %0, %1, %cst {dimension_numbers = #tpu.dot_dimension_numbers<[1], [0], [0], [1], [0, 0, 1, 1], [], []>} : vector<32x128xbf16>, vector<128x128xbf16>, vector<32x128xf32> -> vector<32x128xf32>
    %c0_3 = arith.constant 0 : index
    %c0_4 = arith.constant 0 : index
    %3 = vector.load %arg3[%c0_3, %c0_4] : memref<1x128xf32, #tpu.memory_space<vmem>>, vector<1x128xf32>
    %4 = vector.broadcast %3 : vector<1x128xf32> to vector<32x128xf32>
    %5 = arith.addf %2, %4 : vector<32x128xf32>
    %6 = math.tanh %5 : vector<32x128xf32>
    %7 = arith.truncf %6 : vector<32x128xf32> to vector<32x128xbf16>
    %c0_5 = arith.constant 0 : index
    %c0_6 = arith.constant 0 : index
    %8 = vector.load %arg4[%c0_5, %c0_6] : memref<128x128xbf16, #tpu.memory_space<vmem>>, vector<128x128xbf16>
    %cst_7 = arith.constant dense<0.000000e+00> : vector<32x128xf32>
    %9 = tpu.matmul %7, %8, %cst_7 {dimension_numbers = #tpu.dot_dimension_numbers<[1], [0], [0], [1], [0, 0, 1, 1], [], []>} : vector<32x128xbf16>, vector<128x128xbf16>, vector<32x128xf32> -> vector<32x128xf32>
    %c0_8 = arith.constant 0 : index
    %c0_9 = arith.constant 0 : index
    %10 = vector.load %arg5[%c0_8, %c0_9] : memref<1x128xf32, #tpu.memory_space<vmem>>, vector<1x128xf32>
    %11 = vector.broadcast %10 : vector<1x128xf32> to vector<32x128xf32>
    %12 = arith.addf %9, %11 : vector<32x128xf32>
    %13 = math.tanh %12 : vector<32x128xf32>
    %c0_10 = arith.constant 0 : index
    %c0_11 = arith.constant 0 : index
    %14 = vector.load %arg6[%c0_10, %c0_11] : memref<32x128xf32, #tpu.memory_space<vmem>>, vector<32x128xf32>
    tpu.vector_store %arg6[%c0_10, %c0_11], %13 {strides = array<i32>} : memref<32x128xf32, #tpu.memory_space<vmem>>, vector<32x128xf32>,
    return
  }
  func.func @transform_0(%arg0: i32) -> (i32, i32) {
    %c0_i32 = arith.constant 0 : i32
    %c0_i32_0 = arith.constant 0 : i32
    return %arg0, %c0_i32 : i32, i32
  }
  func.func @transform_1(%arg0: i32) -> (i32, i32) {
    %c0_i32 = arith.constant 0 : i32
    %c0_i32_0 = arith.constant 0 : i32
    %c0_i32_1 = arith.constant 0 : i32
    return %c0_i32, %c0_i32_0 : i32, i32
  }
  func.func @transform_2(%arg0: i32) -> (i32, i32) {
    %c0_i32 = arith.constant 0 : i32
    %c0_i32_0 = arith.constant 0 : i32
    %c0_i32_1 = arith.constant 0 : i32
    return %c0_i32, %c0_i32_0 : i32, i32
  }
  func.func @transform_3(%arg0: i32) -> (i32, i32) {
    %c0_i32 = arith.constant 0 : i32
    %c0_i32_0 = arith.constant 0 : i32
    %c0_i32_1 = arith.constant 0 : i32
    return %c0_i32, %c0_i32_0 : i32, i32
  }
  func.func @transform_4(%arg0: i32) -> (i32, i32) {
    %c0_i32 = arith.constant 0 : i32
    %c0_i32_0 = arith.constant 0 : i32
    %c0_i32_1 = arith.constant 0 : i32
    return %c0_i32, %c0_i32_0 : i32, i32
  }
  func.func @transform_5(%arg0: i32) -> (i32, i32) {
    %c0_i32 = arith.constant 0 : i32
    %c0_i32_0 = arith.constant 0 : i32
    return %arg0, %c0_i32 : i32, i32
  }
}

</mosaic_0001>

<llo_original>
// kernel: tpu_custom_call.1
$region0: #{tpu_custom_call.1}
  #allocation0 [shape = 'u32[]', space=smem, size = 0x4, offset = 0x4, fixed_abs, tag = 'smem constant byte address 0x4 - core index']
  #allocation1 [shape = 'u32[144,128]{1,0:T(1,128)}', space=vmem, size = 0x12000, scoped, tag = 'internal scratch']
  %s0 = inlined_call_operand.hbm [shape: bf16[32,128], index: 0, kind: input, shape index: {}]
  %s1 = inlined_call_operand.hbm [shape: bf16[128,128], index: 1, kind: input, shape index: {}]
  %s2 = inlined_call_operand.hbm [shape: f32[1,128], index: 2, kind: input, shape index: {}]
  %s3 = inlined_call_operand.hbm [shape: bf16[128,128], index: 3, kind: input, shape index: {}]
  %s4 = inlined_call_operand.hbm [shape: f32[1,128], index: 4, kind: input, shape index: {}]
  %s5 = inlined_call_operand.hbm [shape: f32[32,128], index: 5, kind: output, shape index: {}]
  %s6 = sld [smem:[#allocation0]]
  $region50: #{tpu_custom_call.1} parent=0
    _
  %s8 = ssub.s32 1, %s6
  %s9 = scalar_select 0, %s8, %s6
  $region1: #{tpu_custom_call.1} parent=0
    #allocation2 [shape = 'u8[8192]{0}', space=vmem, size = 0x2000, scoped, tag = 'input window, operand 0, single buffered']
    #allocation3 [shape = 's32[1]{0}', space=sflag, size = 0x4, scoped, tag = 'scoped memory for tpu_custom_call.1']
    #allocation4 [shape = 's32[1]{0}', space=sflag, size = 0x4, scoped, tag = 'scoped memory for tpu_custom_call.1']
    #allocation5 [shape = 'u8[32768]{0}', space=vmem, size = 0x8000, scoped, tag = 'input window, operand 1, single buffered']
    #allocation6 [shape = 's32[1]{0}', space=sflag, size = 0x4, scoped, tag = 'scoped memory for tpu_custom_call.1']
    #allocation7 [shape = 'u8[512]{0}', space=vmem, size = 0x400, scoped, tag = 'input window, operand 2, single buffered']
    #allocation8 [shape = 'u8[32768]{0}', space=vmem, size = 0x8000, scoped, tag = 'input window, operand 3, single buffered']
    #allocation9 [shape = 's32[1]{0}', space=sflag, size = 0x4, scoped, tag = 'scoped memory for tpu_custom_call.1']
    #allocation10 [shape = 'u8[512]{0}', space=vmem, size = 0x400, scoped, tag = 'input window, operand 4, single buffered']
    #allocation11 [shape = 'u8[16384]{0}', space=vmem, size = 0x4000, scoped, tag = 'output window, operand 0, single buffered']
    %10 = vsyncpa [#allocation3], 0
    %11 = vsyncpa [#allocation6], 0
    %12 = vsyncpa [#allocation9], 0
    %13 = vsyncpa [#allocation4], 0
    // Predicated region
    $region2: #{tpu_custom_call.1} parent=1 // pred_check
      _
    $region3: #{tpu_custom_call.1} parent=1 // pred_check_branch
      %15 = sbr.rel (0) target = $region5
    $region4: #{tpu_custom_call.1} parent=1 // pred_region
      %s17 = ssub.s32 256, 256
      %18 = vsyncadd [#allocation3], %s17
      %s19 = sshll.u32 [#allocation2], 4
      %s20 = int_to_ptr.vmem [resolvable:$true] %s19
      %25 = dma.hbm_to_vmem [thread:$0]  %s0, 256, %s20, [#allocation3], 64, 64, 4
    $region5: #{tpu_custom_call.1} parent=1 // pred_fallthru
      _
    // Predicated region
    $region6: #{tpu_custom_call.1} parent=1 // pred_check
      _
    $region7: #{tpu_custom_call.1} parent=1 // pred_check_branch
      %27 = sbr.rel (0) target = $region9
    $region8: #{tpu_custom_call.1} parent=1 // pred_region
      %s29 = ssub.s32 1024, 1024
      %30 = vsyncadd [#allocation6], %s29
      %s31 = sshll.u32 [#allocation5], 4
      %s32 = int_to_ptr.vmem [resolvable:$true] %s31
      %37 = dma.hbm_to_vmem [thread:$0]  %s1, 1024, %s32, [#allocation6], 64, 64, 4
    $region9: #{tpu_custom_call.1} parent=1 // pred_fallthru
      _
    // Predicated region
    $region10: #{tpu_custom_call.1} parent=1 // pred_check
      _
    $region11: #{tpu_custom_call.1} parent=1 // pred_check_branch
      %39 = sbr.rel (0) target = $region13
    $region12: #{tpu_custom_call.1} parent=1 // pred_region
      %s41 = ssub.s32 16, 16
      %42 = vsyncadd [#allocation6], %s41
      %s44 = sshll.u32 [#allocation7], 4
      %s45 = int_to_ptr.vmem [resolvable:$true] %s44
      %47 = dma.hbm_to_vmem [thread:$0]  %s2, 16, %s45, [#allocation6]
    $region13: #{tpu_custom_call.1} parent=1 // pred_fallthru
      _
    // Predicated region
    $region14: #{tpu_custom_call.1} parent=1 // pred_check
      _
    $region15: #{tpu_custom_call.1} parent=1 // pred_check_branch
      %49 = sbr.rel (0) target = $region17
    $region16: #{tpu_custom_call.1} parent=1 // pred_region
      %s51 = ssub.s32 1024, 1024
      %52 = vsyncadd [#allocation9], %s51
      %s53 = sshll.u32 [#allocation8], 4
      %s54 = int_to_ptr.vmem [resolvable:$true] %s53
      %59 = dma.hbm_to_vmem [thread:$0]  %s3, 1024, %s54, [#allocation9], 64, 64, 4
    $region17: #{tpu_custom_call.1} parent=1 // pred_fallthru
      _
    // Predicated region
    $region18: #{tpu_custom_call.1} parent=1 // pred_check
      _
    $region19: #{tpu_custom_call.1} parent=1 // pred_check_branch
      %61 = sbr.rel (0) target = $region21
    $region20: #{tpu_custom_call.1} parent=1 // pred_region
      %s63 = ssub.s32 16, 16
      %64 = vsyncadd [#allocation9], %s63
      %s66 = sshll.u32 [#allocation10], 4
      %s67 = int_to_ptr.vmem [resolvable:$true] %s66
      %69 = dma.hbm_to_vmem [thread:$0]  %s4, 16, %s67, [#allocation9]
    $region21: #{tpu_custom_call.1} parent=1 // pred_fallthru
      _
    // Predicated region
    $region22: #{tpu_custom_call.1} parent=1 // pred_check
      _
    $region23: #{tpu_custom_call.1} parent=1 // pred_check_branch
      %71 = sbr.rel (0) target = $region25
    $region24: #{tpu_custom_call.1} parent=1 // pred_region
      %72 = dma.done [#allocation3], 256
    $region25: #{tpu_custom_call.1} parent=1 // pred_fallthru
      _
    // Predicated region
    $region26: #{tpu_custom_call.1} parent=1 // pred_check
      _
    $region27: #{tpu_custom_call.1} parent=1 // pred_check_branch
      %74 = sbr.rel (0) target = $region29
    $region28: #{tpu_custom_call.1} parent=1 // pred_region
      %75 = dma.done [#allocation6], 1024
    $region29: #{tpu_custom_call.1} parent=1 // pred_fallthru
      _
    // Predicated region
    $region30: #{tpu_custom_call.1} parent=1 // pred_check
      _
    $region31: #{tpu_custom_call.1} parent=1 // pred_check_branch
      %77 = sbr.rel (0) target = $region33
    $region32: #{tpu_custom_call.1} parent=1 // pred_region
      %78 = dma.done [#allocation6], 16
    $region33: #{tpu_custom_call.1} parent=1 // pred_fallthru
      _
    // Predicated region
    $region34: #{tpu_custom_call.1} parent=1 // pred_check
      _
    $region35: #{tpu_custom_call.1} parent=1 // pred_check_branch
      %80 = sbr.rel (0) target = $region37
    $region36: #{tpu_custom_call.1} parent=1 // pred_region
      %81 = dma.done [#allocation9], 1024
    $region37: #{tpu_custom_call.1} parent=1 // pred_fallthru
      _
    // Predicated region
    $region38: #{tpu_custom_call.1} parent=1 // pred_check
      _
    $region39: #{tpu_custom_call.1} parent=1 // pred_check_branch
      %83 = sbr.rel (0) target = $region41
    $region40: #{tpu_custom_call.1} parent=1 // pred_region
      %84 = dma.done [#allocation9], 16
    $region41: #{tpu_custom_call.1} parent=1 // pred_fallthru
      _
    %v86 = vld [vmem:[#allocation2] sm:$0xf]
    %v87 = vld [vmem:[#allocation2 + $0x4] sm:$0xf]
    %v88 = vld [vmem:[#allocation2 + $0x8] sm:$0xf]
    %v89 = vld [vmem:[#allocation2 + $0xc] sm:$0xf]
    %v90 = vld [vmem:[#allocation5] sm:$0xf]
    %v91 = vld [vmem:[#allocation5 + $0x4] sm:$0xf]
    %v92 = vld [vmem:[#allocation5 + $0x8] sm:$0xf]
    %v93 = vld [vmem:[#allocation5 + $0xc] sm:$0xf]
    %v94 = vld [vmem:[#allocation5 + $0x10] sm:$0xf]
    %v95 = vld [vmem:[#allocation5 + $0x14] sm:$0xf]
    %v96 = vld [vmem:[#allocation5 + $0x18] sm:$0xf]
    %v97 = vld [vmem:[#allocation5 + $0x1c] sm:$0xf]
    %v98 = vld [vmem:[#allocation5 + $0x20] sm:$0xf]
    %v99 = vld [vmem:[#allocation5 + $0x24] sm:$0xf]
    %v100 = vld [vmem:[#allocation5 + $0x28] sm:$0xf]
    %v101 = vld [vmem:[#allocation5 + $0x2c] sm:$0xf]
    %v102 = vld [vmem:[#allocation5 + $0x30] sm:$0xf]
    %v103 = vld [vmem:[#allocation5 + $0x34] sm:$0xf]
    %v104 = vld [vmem:[#allocation5 + $0x38] sm:$0xf]
    %v105 = vld [vmem:[#allocation5 + $0x3c] sm:$0xf]
    %v106 = vld [vmem:[#allocation7] sm:$0x1]
    %v108 = vlaneseq
    %v109 = vshrl.u32 %v108, 7
    %v110 = vsub.s32 0, %v109
    %v111 = vrot.slane %v106, %v110
    %v117 = vunpack.c.l.b16 %v86
    %v118 = vunpack.c.l.b16 %v87
    %v119 = vunpack.c.l.b16 %v88
    %v120 = vunpack.c.l.b16 %v89
    %v121 = vpack.c.b16 %v118, %v117
    %v122 = vpack.c.b16 %v120, %v119
    %v141 = vunpack.c.l.b16 %v90
    %v142 = vunpack.c.l.b16 %v91
    %v143 = vunpack.c.l.b16 %v92
    %v144 = vunpack.c.l.b16 %v93
    %v145 = vunpack.c.l.b16 %v94
    %v146 = vunpack.c.l.b16 %v95
    %v147 = vunpack.c.l.b16 %v96
    %v148 = vunpack.c.l.b16 %v97
    %v149 = vunpack.c.l.b16 %v98
    %v150 = vunpack.c.l.b16 %v99
    %v151 = vunpack.c.l.b16 %v100
    %v152 = vunpack.c.l.b16 %v101
    %v153 = vunpack.c.l.b16 %v102
    %v154 = vunpack.c.l.b16 %v103
    %v155 = vunpack.c.l.b16 %v104
    %v156 = vunpack.c.l.b16 %v105
    %v157 = vpack.c.b16 %v142, %v141
    %v158 = vpack.c.b16 %v144, %v143
    %v159 = vpack.c.b16 %v146, %v145
    %v160 = vpack.c.b16 %v148, %v147
    %v161 = vpack.c.b16 %v150, %v149
    %v162 = vpack.c.b16 %v152, %v151
    %v163 = vpack.c.b16 %v154, %v153
    %v164 = vpack.c.b16 %v156, %v155
    %173 = vmatprep.subr.bf16.mxu0 0
    %174 = vmatpush1.bf16.msra.mxu0 %v157
    %175 = vmatprep.subr.bf16.mxu0 0
    %176 = vmatpush1.bf16.msra.mxu0 %v158
    %177 = vmatprep.subr.bf16.mxu0 0
    %178 = vmatpush1.bf16.msra.mxu0 %v159
    %179 = vmatprep.subr.bf16.mxu0 0
    %180 = vmatpush1.bf16.msra.mxu0 %v160
    %181 = vmatprep.subr.bf16.mxu0 0
    %182 = vmatpush1.bf16.msra.mxu0 %v161
    %183 = vmatprep.subr.bf16.mxu0 0
    %184 = vmatpush1.bf16.msra.mxu0 %v162
    %185 = vmatprep.subr.bf16.mxu0 0
    %186 = vmatpush1.bf16.msra.mxu0 %v163
    %187 = vmatprep.subr.bf16.mxu0 0
    %188 = vmatpush1.bf16.msra.mxu0 %v164
    %189 = vmatprep.subr.bf16.mxu0 0
    %190 = vmatpush1.bf16.msra.mxu0 0
    %191 = vmatprep.subr.bf16.mxu0 0
    %192 = vmatpush1.bf16.msra.mxu0 0
    %193 = vmatprep.subr.bf16.mxu0 0
    %194 = vmatpush1.bf16.msra.mxu0 0
    %195 = vmatprep.subr.bf16.mxu0 0
    %196 = vmatpush1.bf16.msra.mxu0 0
    %197 = vmatprep.subr.bf16.mxu0 0
    %198 = vmatpush1.bf16.msra.mxu0 0
    %199 = vmatprep.subr.bf16.mxu0 0
    %200 = vmatpush1.bf16.msra.mxu0 0
    %201 = vmatprep.subr.bf16.mxu0 0
    %202 = vmatpush1.bf16.msra.mxu0 0
    %203 = vmatprep.subr.bf16.mxu0 0
    %204 = vmatpush1.bf16.msra.mxu0 0
    %205 = vmatprep.mubr.bf16.mxu0 0
    %206 = vmatmul.mubr.bf16.gmra.mrb[0].mxu0 %v121
    %v207 = vpop.f32.mrb[0].mxu0
    %v208 = vadd.f32 %v111, %v207
    %v209 = vpop.f32.mrb[0].mxu0
    %v210 = vpop.f32.mrb[0].mxu0
    %v211 = vadd.f32 %v111, %v210
    %v212 = vpop.f32.mrb[0].mxu0
    %213 = vmatprep.mubr.bf16.mxu0 0
    %214 = vmatmul.mubr.bf16.gmra.mrb[0].mxu0 %v122
    %v215 = vpop.f32.mrb[0].mxu0
    %v216 = vadd.f32 %v111, %v215
    %v217 = vpop.f32.mrb[0].mxu0
    %v218 = vpop.f32.mrb[0].mxu0
    %v219 = vadd.f32 %v111, %v218
    %v220 = vpop.f32.mrb[0].mxu0
    %221 = vdwg.mxu0
    %v222 = vtanh.pop %v208
    %v223 = vtanh.pop %v211
    %v224 = vtanh.pop %v216
    %v225 = vtanh.pop %v219
    %v226 = vpack.c.bf16 %v223, %v222
    %v227 = vpack.c.bf16 %v225, %v224
    %v228 = vld [vmem:[#allocation8] sm:$0xf]
    %v229 = vld [vmem:[#allocation8 + $0x4] sm:$0xf]
    %v230 = vld [vmem:[#allocation8 + $0x8] sm:$0xf]
    %v231 = vld [vmem:[#allocation8 + $0xc] sm:$0xf]
    %v232 = vld [vmem:[#allocation8 + $0x10] sm:$0xf]
    %v233 = vld [vmem:[#allocation8 + $0x14] sm:$0xf]
    %v234 = vld [vmem:[#allocation8 + $0x18] sm:$0xf]
    %v235 = vld [vmem:[#allocation8 + $0x1c] sm:$0xf]
    %v236 = vld [vmem:[#allocation8 + $0x20] sm:$0xf]
    %v237 = vld [vmem:[#allocation8 + $0x24] sm:$0xf]
    %v238 = vld [vmem:[#allocation8 + $0x28] sm:$0xf]
    %v239 = vld [vmem:[#allocation8 + $0x2c] sm:$0xf]
    %v240 = vld [vmem:[#allocation8 + $0x30] sm:$0xf]
    %v241 = vld [vmem:[#allocation8 + $0x34] sm:$0xf]
    %v242 = vld [vmem:[#allocation8 + $0x38] sm:$0xf]
    %v243 = vld [vmem:[#allocation8 + $0x3c] sm:$0xf]
    %v244 = vld [vmem:[#allocation10] sm:$0x1]
    %v246 = vlaneseq
    %v247 = vshrl.u32 %v246, 7
    %v248 = vsub.s32 0, %v247
    %v249 = vrot.slane %v244, %v248
    %v267 = vunpack.c.l.b16 %v228
    %v268 = vunpack.c.l.b16 %v229
    %v269 = vunpack.c.l.b16 %v230
    %v270 = vunpack.c.l.b16 %v231
    %v271 = vunpack.c.l.b16 %v232
    %v272 = vunpack.c.l.b16 %v233
    %v273 = vunpack.c.l.b16 %v234
    %v274 = vunpack.c.l.b16 %v235
    %v275 = vunpack.c.l.b16 %v236
    %v276 = vunpack.c.l.b16 %v237
    %v277 = vunpack.c.l.b16 %v238
    %v278 = vunpack.c.l.b16 %v239
    %v279 = vunpack.c.l.b16 %v240
    %v280 = vunpack.c.l.b16 %v241
    %v281 = vunpack.c.l.b16 %v242
    %v282 = vunpack.c.l.b16 %v243
    %v283 = vpack.c.b16 %v268, %v267
    %v284 = vpack.c.b16 %v270, %v269
    %v285 = vpack.c.b16 %v272, %v271
    %v286 = vpack.c.b16 %v274, %v273
    %v287 = vpack.c.b16 %v276, %v275
    %v288 = vpack.c.b16 %v278, %v277
    %v289 = vpack.c.b16 %v280, %v279
    %v290 = vpack.c.b16 %v282, %v281
    %299 = vmatprep.subr.bf16.mxu0 0
    %300 = vmatpush1.bf16.msra.mxu0 %v283
    %301 = vmatprep.subr.bf16.mxu0 0
    %302 = vmatpush1.bf16.msra.mxu0 %v284
    %303 = vmatprep.subr.bf16.mxu0 0
    %304 = vmatpush1.bf16.msra.mxu0 %v285
    %305 = vmatprep.subr.bf16.mxu0 0
    %306 = vmatpush1.bf16.msra.mxu0 %v286
    %307 = vmatprep.subr.bf16.mxu0 0
    %308 = vmatpush1.bf16.msra.mxu0 %v287
    %309 = vmatprep.subr.bf16.mxu0 0
    %310 = vmatpush1.bf16.msra.mxu0 %v288
    %311 = vmatprep.subr.bf16.mxu0 0
    %312 = vmatpush1.bf16.msra.mxu0 %v289
    %313 = vmatprep.subr.bf16.mxu0 0
    %314 = vmatpush1.bf16.msra.mxu0 %v290
    %315 = vmatprep.subr.bf16.mxu0 0
    %316 = vmatpush1.bf16.msra.mxu0 0
    %317 = vmatprep.subr.bf16.mxu0 0
    %318 = vmatpush1.bf16.msra.mxu0 0
    %319 = vmatprep.subr.bf16.mxu0 0
    %320 = vmatpush1.bf16.msra.mxu0 0
    %321 = vmatprep.subr.bf16.mxu0 0
    %322 = vmatpush1.bf16.msra.mxu0 0
    %323 = vmatprep.subr.bf16.mxu0 0
    %324 = vmatpush1.bf16.msra.mxu0 0
    %325 = vmatprep.subr.bf16.mxu0 0
    %326 = vmatpush1.bf16.msra.mxu0 0
    %327 = vmatprep.subr.bf16.mxu0 0
    %328 = vmatpush1.bf16.msra.mxu0 0
    %329 = vmatprep.subr.bf16.mxu0 0
    %330 = vmatpush1.bf16.msra.mxu0 0
    %331 = vmatprep.mubr.bf16.mxu0 0
    %332 = vmatmul.mubr.bf16.gmra.mrb[0].mxu0 %v226
    %v333 = vpop.f32.mrb[0].mxu0
    %v334 = vadd.f32 %v249, %v333
    %v335 = vpop.f32.mrb[0].mxu0
    %v336 = vpop.f32.mrb[0].mxu0
    %v337 = vadd.f32 %v249, %v336
    %v338 = vpop.f32.mrb[0].mxu0
    %339 = vmatprep.mubr.bf16.mxu0 0
    %340 = vmatmul.mubr.bf16.gmra.mrb[0].mxu0 %v227
    %v341 = vpop.f32.mrb[0].mxu0
    %v342 = vadd.f32 %v249, %v341
    %v343 = vpop.f32.mrb[0].mxu0
    %v344 = vpop.f32.mrb[0].mxu0
    %v345 = vadd.f32 %v249, %v344
    %v346 = vpop.f32.mrb[0].mxu0
    %347 = vdwg.mxu0
    %v348 = vtanh.pop %v334
    %v349 = vtanh.pop %v337
    %v350 = vtanh.pop %v342
    %v351 = vtanh.pop %v345
    %352 = vst [vmem:[#allocation11] sm:$0xff] %v348
    %353 = vst [vmem:[#allocation11 + $0x8] sm:$0xff] %v349
    %354 = vst [vmem:[#allocation11 + $0x10] sm:$0xff] %v350
    %355 = vst [vmem:[#allocation11 + $0x18] sm:$0xff] %v351
    // Predicated region
    $region42: #{tpu_custom_call.1} parent=1 // pred_check
      _
    $region43: #{tpu_custom_call.1} parent=1 // pred_check_branch
      %357 = sbr.rel (0) target = $region45
    $region44: #{tpu_custom_call.1} parent=1 // pred_region
      %s359 = ssub.s32 512, 512
      %360 = vsyncadd [#allocation4], %s359
      %s361 = sshll.u32 [#allocation11], 4
      %s362 = int_to_ptr.vmem [resolvable:$true] %s361
      %367 = dma.vmem_to_hbm [thread:$0]  %s362, 512, %s5, [#allocation4], 128, 128, 8
    $region45: #{tpu_custom_call.1} parent=1 // pred_fallthru
      _
    // Predicated region
    $region46: #{tpu_custom_call.1} parent=1 // pred_check
      _
    $region47: #{tpu_custom_call.1} parent=1 // pred_check_branch
      %369 = sbr.rel (0) target = $region49
    $region48: #{tpu_custom_call.1} parent=1 // pred_region
      %370 = dma.done [#allocation4], 512
    $region49: #{tpu_custom_call.1} parent=1 // pred_fallthru
      _
    %371 = vsyncpa [#allocation3], 1
    %372 = vsyncpa [#allocation6], 1
    %373 = vsyncpa [#allocation9], 1
    %374 = vsyncpa [#allocation4], 1

</llo_original>
